<compile_context>
chip_gen: v7x
topology: tpu7x:2x2x1
jax: 0.10.0
libtpu: 0.0.40
codegen_flags: <defaults>
</compile_context>

<pallas_src>
import functools

import jax
import jax.numpy as jnp
from jax import lax
from jax.experimental import pallas as pl
from jax.experimental.pallas import tpu as pltpu

_SQRT2 = 1.4142135623730951
_SQRT_2_OVER_PI = 0.7978845608028654


def _gelu_exact(x):
    # PyTorch nn.GELU() default = exact erf-based GELU.
    return 0.5 * x * (1.0 + lax.erf(x / _SQRT2))


def _gelu_tanh(x):
    # Optional tanh approximation: transcendental goes to the otherwise-idle EUP slot.
    return 0.5 * x * (1.0 + jnp.tanh(_SQRT_2_OVER_PI * (x + 0.044715 * x * x * x)))


def _mlp_kernel(x_ref, w1_ref, b1_ref, w2_ref, b2_ref, w3_ref, b3_ref, o_ref, *,
                tanh_gelu):
    act = _gelu_tanh if tanh_gelu else _gelu_exact
    mm_dtype = w1_ref.dtype  # f32, or bf16 when the wrapper downcast the weights.

    # x lives in HBM as f32; cast in-register right before the first matmul so the
    # bf16 MXU rate is obtained with zero extra HBM traffic.
    x = x_ref[...].astype(mm_dtype)

    # fc1 + GELU (f32 accumulation, f32 elementwise — v5e-friendly).
    h = jnp.dot(x, w1_ref[...], preferred_element_type=jnp.float32)
    h = act(h + b1_ref[...])
    # fc2 + GELU
    h = jnp.dot(h.astype(mm_dtype), w2_ref[...], preferred_element_type=jnp.float32)
    h = act(h + b2_ref[...])
    # fc3 (output lanes padded to 128 by the wrapper -> lane-dense unmasked stores).
    h = jnp.dot(h.astype(mm_dtype), w3_ref[...], preferred_element_type=jnp.float32)
    o_ref[...] = (h + b3_ref[...]).astype(o_ref.dtype)


def _round_up(n, m):
    return ((n + m - 1) // m) * m


def _choose_tiling(B, block_b):
    """Pick (steps, rows_per_step) with minimal row padding.

    * tiles are multiples of 8 (f32 sublane); total padding <= 8*steps - 1 rows,
      so awkward batch sizes never trigger a whole-array jnp.pad of x.
    * v7x megacore: any batch >= 128 rows gets an even number (>= 2) of "parallel"
      steps so both TensorCores get work.
    * rows capped at 1024 so even the exact-f32 path fits v5e's 16 MiB default
      scoped VMEM (double-buffered x tile + resident weights).
    """
    block_b = max(8, min(int(block_b), 1024))
    B8 = _round_up(max(B, 1), 8)
    steps = pl.cdiv(B8, block_b)
    if B8 >= 128:
        steps = max(steps, 2)
        if steps % 2:
            steps += 1
    rows = _round_up(pl.cdiv(B8, steps), 8)
    return steps, rows


@functools.partial(jax.jit,
                   static_argnames=("block_b", "use_bf16", "tanh_gelu", "out_padded"))
def medium_network_forward(x, w1, b1, w2, b2, w3, b3, *, block_b=512,
                           use_bf16=True, tanh_gelu=False, out_padded=False):
    """x: (B, 784) f32. Weights are (in, out); biases are (1, out)."""
    B, D_in = x.shape
    assert D_in == 28 * 28
    D1, D2, D_out = w1.shape[1], w2.shape[1], w3.shape[1]

    # ---- pad the final layer to 128 output lanes (lane-dense output block). ----
    D_out_pad = _round_up(D_out, 128)
    w3p = jnp.pad(w3, ((0, 0), (0, D_out_pad - D_out)))
    b3p = jnp.pad(b3, ((0, 0), (0, D_out_pad - D_out)))

    # ---- batch tiling: minimal padding, even parallel steps for megacore. ----
    steps, eff_block = _choose_tiling(B, block_b)
    B_pad = steps * eff_block
    xp = x if B_pad == B else jnp.pad(x, ((0, B_pad - B), (0, 0)))

    # bf16 MXU inputs with f32 accumulation are supported and fast on v5e/v6e/v7x.
    # Only the (small) weights are downcast here; x is cast inside the kernel.
    if use_bf16:
        w1c, w2c, w3c = (w.astype(jnp.bfloat16) for w in (w1, w2, w3p))
    else:
        w1c, w2c, w3c = w1, w2, w3p

    w_bytes = ((w1c.size + w2c.size + w3c.size) * w1c.dtype.itemsize
               + (b1.size + b2.size + b3p.size) * 4)
    cost = pl.CostEstimate(
        flops=2 * B_pad * (D_in * D1 + D1 * D2 + D2 * D_out_pad),
        transcendentals=B_pad * (D1 + D2),
        bytes_accessed=B_pad * D_in * 4 + w_bytes + B_pad * D_out_pad * 4,
    )

    out = pl.pallas_call(
        functools.partial(_mlp_kernel, tanh_gelu=tanh_gelu),
        out_shape=jax.ShapeDtypeStruct((B_pad, D_out_pad), jnp.float32),
        grid_spec=pltpu.PrefetchScalarGridSpec(
            num_scalar_prefetch=0,
            grid=(steps,),
            in_specs=[
                pl.BlockSpec((eff_block, D_in), lambda i: (i, 0)),   # x tile (f32)
                pl.BlockSpec((D_in, D1), lambda i: (0, 0)),          # W1 (resident)
                pl.BlockSpec((1, D1), lambda i: (0, 0)),             # b1
                pl.BlockSpec((D1, D2), lambda i: (0, 0)),            # W2
                pl.BlockSpec((1, D2), lambda i: (0, 0)),             # b2
                pl.BlockSpec((D2, D_out_pad), lambda i: (0, 0)),     # W3 (lane-padded)
                pl.BlockSpec((1, D_out_pad), lambda i: (0, 0)),      # b3 (lane-padded)
            ],
            out_specs=pl.BlockSpec((eff_block, D_out_pad), lambda i: (i, 0)),
        ),
        compiler_params=pltpu.CompilerParams(
            dimension_semantics=("parallel",)),
        cost_estimate=cost,
    )(xp, w1c, b1, w2c, b2, w3c, b3p)

    if out_padded:
        # Consumer accepts padded logits: skip the extra HBM pass of the slice.
        # Real logits live in out[:B, :D_out].
        return out
    return out[:B, :D_out]


def _init_linear(key, fan_in, fan_out):
    # Deterministic init mimicking PyTorch nn.Linear default: U(-1/sqrt(fan_in), +).
    kw, kb = jax.random.split(key)
    bound = 1.0 / jnp.sqrt(fan_in)
    w = jax.random.uniform(kw, (fan_in, fan_out), jnp.float32, -bound, bound)
    b = jax.random.uniform(kb, (1, fan_out), jnp.float32, -bound, bound)
    return w, b


if __name__ == "__main__":
    key = jax.random.PRNGKey(0)
    kx1, kx2, k1, k2, k3 = jax.random.split(key, 5)

    w1, b1 = _init_linear(k1, 28 * 28, 256)
    w2, b2 = _init_linear(k2, 256, 128)
    w3, b3 = _init_linear(k3, 128, 10)

    def ref(x):
        h = jax.nn.gelu(x @ w1 + b1, approximate=False)
        h = jax.nn.gelu(h @ w2 + b2, approximate=False)
        return h @ w3 + b3

    # Small, non-multiple-of-8 batch: single grid step + minimal row padding.
    x_small = jax.random.normal(kx1, (20, 28 * 28), jnp.float32)

    # Exact-PyTorch config (f32 matmuls + erf GELU): tight tolerance.
    out_exact = jax.block_until_ready(
        medium_network_forward(x_small, w1, b1, w2, b2, w3, b3,
                               use_bf16=False, tanh_gelu=False))
    assert out_exact.shape == (20, 10)
    assert jnp.allclose(out_exact, ref(x_small), atol=1e-4, rtol=1e-4)

    # Default fast config (bf16 MXU inputs, f32 accumulation + erf GELU): looser check.
    out_fast = jax.block_until_ready(
        medium_network_forward(x_small, w1, b1, w2, b2, w3, b3))
    assert out_fast.shape == (20, 10)
    assert jnp.allclose(out_fast, ref(x_small), atol=5e-2, rtol=5e-2)

    # Larger, awkward batch: even multi-step "parallel" grid (v7x megacore) with only
    # a few rows of tail padding instead of a whole-array pad.
    x_big = jax.random.normal(kx2, (300, 28 * 28), jnp.float32)
    out_big = jax.block_until_ready(
        medium_network_forward(x_big, w1, b1, w2, b2, w3, b3))
    assert out_big.shape == (300, 10)
    assert jnp.allclose(out_big, ref(x_big), atol=5e-2, rtol=5e-2)

    print("KERNEL_OK")
</pallas_src>

<mosaic_0001>
module attributes {stable_mosaic.version = 11 : i64} {
  func.func @_mlp_kernel(%arg0: i32, %arg1: memref<24x784xf32, #tpu.memory_space<vmem>>, %arg2: memref<784x256xf32, #tpu.memory_space<vmem>>, %arg3: memref<1x256xf32, #tpu.memory_space<vmem>>, %arg4: memref<256x128xf32, #tpu.memory_space<vmem>>, %arg5: memref<1x128xf32, #tpu.memory_space<vmem>>, %arg6: memref<128x128xf32, #tpu.memory_space<vmem>>, %arg7: memref<1x128xf32, #tpu.memory_space<vmem>>, %arg8: memref<24x128xf32, #tpu.memory_space<vmem>>) attributes {dimension_semantics = [#tpu.dimension_semantics<parallel>], iteration_bounds = array<i64: 1>, scalar_prefetch = 0 : i64, scratch_operands = 0 : i64, tpu.core_type = #tpu.core_type<tc>, window_params = [{transform_indices = @transform_0, window_bounds = array<i64: 24, 784>}, {pipeline_mode = #tpu.pipeline_mode<synchronous>, transform_indices = @transform_1, window_bounds = array<i64: 784, 256>}, {pipeline_mode = #tpu.pipeline_mode<synchronous>, transform_indices = @transform_2, window_bounds = array<i64: 1, 256>}, {pipeline_mode = #tpu.pipeline_mode<synchronous>, transform_indices = @transform_3, window_bounds = array<i64: 256, 128>}, {pipeline_mode = #tpu.pipeline_mode<synchronous>, transform_indices = @transform_4, window_bounds = array<i64: 1, 128>}, {pipeline_mode = #tpu.pipeline_mode<synchronous>, transform_indices = @transform_5, window_bounds = array<i64: 128, 128>}, {pipeline_mode = #tpu.pipeline_mode<synchronous>, transform_indices = @transform_6, window_bounds = array<i64: 1, 128>}, {transform_indices = @transform_7, window_bounds = array<i64: 24, 128>}]} {
    %c0 = arith.constant 0 : index
    %c0_0 = arith.constant 0 : index
    %0 = vector.load %arg1[%c0, %c0_0] : memref<24x784xf32, #tpu.memory_space<vmem>>, vector<24x784xf32>
    %c0_1 = arith.constant 0 : index
    %c0_2 = arith.constant 0 : index
    %1 = vector.load %arg2[%c0_1, %c0_2] : memref<784x256xf32, #tpu.memory_space<vmem>>, vector<784x256xf32>
    %cst = arith.constant dense<0.000000e+00> : vector<24x256xf32>
    %2 = tpu.matmul %0, %1, %cst {dimension_numbers = #tpu.dot_dimension_numbers<[1], [0], [0], [1], [0, 0, 1, 1], [], []>} : vector<24x784xf32>, vector<784x256xf32>, vector<24x256xf32> -> vector<24x256xf32>
    %c0_3 = arith.constant 0 : index
    %c0_4 = arith.constant 0 : index
    %3 = vector.load %arg3[%c0_3, %c0_4] : memref<1x256xf32, #tpu.memory_space<vmem>>, vector<1x256xf32>
    %4 = vector.broadcast %3 : vector<1x256xf32> to vector<24x256xf32>
    %5 = arith.addf %2, %4 : vector<24x256xf32>
    %cst_5 = arith.constant 5.000000e-01 : f32
    %6 = vector.broadcast %cst_5 : f32 to vector<24x256xf32>
    %7 = arith.mulf %6, %5 : vector<24x256xf32>
    %cst_6 = arith.constant 1.41421354 : f32
    %8 = vector.broadcast %cst_6 : f32 to vector<24x256xf32>
    %9 = arith.divf %5, %8 : vector<24x256xf32>
    %10 = math.erf %9 : vector<24x256xf32>
    %cst_7 = arith.constant 1.000000e+00 : f32
    %11 = vector.broadcast %cst_7 : f32 to vector<24x256xf32>
    %12 = arith.addf %11, %10 : vector<24x256xf32>
    %13 = arith.mulf %7, %12 : vector<24x256xf32>
    %c0_8 = arith.constant 0 : index
    %c0_9 = arith.constant 0 : index
    %14 = vector.load %arg4[%c0_8, %c0_9] : memref<256x128xf32, #tpu.memory_space<vmem>>, vector<256x128xf32>
    %cst_10 = arith.constant dense<0.000000e+00> : vector<24x128xf32>
    %15 = tpu.matmul %13, %14, %cst_10 {dimension_numbers = #tpu.dot_dimension_numbers<[1], [0], [0], [1], [0, 0, 1, 1], [], []>} : vector<24x256xf32>, vector<256x128xf32>, vector<24x128xf32> -> vector<24x128xf32>
    %c0_11 = arith.constant 0 : index
    %c0_12 = arith.constant 0 : index
    %16 = vector.load %arg5[%c0_11, %c0_12] : memref<1x128xf32, #tpu.memory_space<vmem>>, vector<1x128xf32>
    %17 = vector.broadcast %16 : vector<1x128xf32> to vector<24x128xf32>
    %18 = arith.addf %15, %17 : vector<24x128xf32>
    %cst_13 = arith.constant 5.000000e-01 : f32
    %19 = vector.broadcast %cst_13 : f32 to vector<24x128xf32>
    %20 = arith.mulf %19, %18 : vector<24x128xf32>
    %cst_14 = arith.constant 1.41421354 : f32
    %21 = vector.broadcast %cst_14 : f32 to vector<24x128xf32>
    %22 = arith.divf %18, %21 : vector<24x128xf32>
    %23 = math.erf %22 : vector<24x128xf32>
    %cst_15 = arith.constant 1.000000e+00 : f32
    %24 = vector.broadcast %cst_15 : f32 to vector<24x128xf32>
    %25 = arith.addf %24, %23 : vector<24x128xf32>
    %26 = arith.mulf %20, %25 : vector<24x128xf32>
    %c0_16 = arith.constant 0 : index
    %c0_17 = arith.constant 0 : index
    %27 = vector.load %arg6[%c0_16, %c0_17] : memref<128x128xf32, #tpu.memory_space<vmem>>, vector<128x128xf32>
    %cst_18 = arith.constant dense<0.000000e+00> : vector<24x128xf32>
    %28 = tpu.matmul %26, %27, %cst_18 {dimension_numbers = #tpu.dot_dimension_numbers<[1], [0], [0], [1], [0, 0, 1, 1], [], []>} : vector<24x128xf32>, vector<128x128xf32>, vector<24x128xf32> -> vector<24x128xf32>
    %c0_19 = arith.constant 0 : index
    %c0_20 = arith.constant 0 : index
    %29 = vector.load %arg7[%c0_19, %c0_20] : memref<1x128xf32, #tpu.memory_space<vmem>>, vector<1x128xf32>
    %30 = vector.broadcast %29 : vector<1x128xf32> to vector<24x128xf32>
    %31 = arith.addf %28, %30 : vector<24x128xf32>
    %c0_21 = arith.constant 0 : index
    %c0_22 = arith.constant 0 : index
    %32 = vector.load %arg8[%c0_21, %c0_22] : memref<24x128xf32, #tpu.memory_space<vmem>>, vector<24x128xf32>
    tpu.vector_store %arg8[%c0_21, %c0_22], %31 {strides = array<i32>} : memref<24x128xf32, #tpu.memory_space<vmem>>, vector<24x128xf32>,
    return
  }
  func.func @transform_0(%arg0: i32) -> (i32, i32) {
    %c0_i32 = arith.constant 0 : i32
    %c0_i32_0 = arith.constant 0 : i32
    return %arg0, %c0_i32 : i32, i32
  }
  func.func @transform_1(%arg0: i32) -> (i32, i32) {
    %c0_i32 = arith.constant 0 : i32
    %c0_i32_0 = arith.constant 0 : i32
    %c0_i32_1 = arith.constant 0 : i32
    return %c0_i32, %c0_i32_0 : i32, i32
  }
  func.func @transform_2(%arg0: i32) -> (i32, i32) {
    %c0_i32 = arith.constant 0 : i32
    %c0_i32_0 = arith.constant 0 : i32
    %c0_i32_1 = arith.constant 0 : i32
    return %c0_i32, %c0_i32_0 : i32, i32
  }
  func.func @transform_3(%arg0: i32) -> (i32, i32) {
    %c0_i32 = arith.constant 0 : i32
    %c0_i32_0 = arith.constant 0 : i32
    %c0_i32_1 = arith.constant 0 : i32
    return %c0_i32, %c0_i32_0 : i32, i32
  }
  func.func @transform_4(%arg0: i32) -> (i32, i32) {
    %c0_i32 = arith.constant 0 : i32
    %c0_i32_0 = arith.constant 0 : i32
    %c0_i32_1 = arith.constant 0 : i32
    return %c0_i32, %c0_i32_0 : i32, i32
  }
  func.func @transform_5(%arg0: i32) -> (i32, i32) {
    %c0_i32 = arith.constant 0 : i32
    %c0_i32_0 = arith.constant 0 : i32
    %c0_i32_1 = arith.constant 0 : i32
    return %c0_i32, %c0_i32_0 : i32, i32
  }
  func.func @transform_6(%arg0: i32) -> (i32, i32) {
    %c0_i32 = arith.constant 0 : i32
    %c0_i32_0 = arith.constant 0 : i32
    %c0_i32_1 = arith.constant 0 : i32
    return %c0_i32, %c0_i32_0 : i32, i32
  }
  func.func @transform_7(%arg0: i32) -> (i32, i32) {
    %c0_i32 = arith.constant 0 : i32
    %c0_i32_0 = arith.constant 0 : i32
    return %arg0, %c0_i32 : i32, i32
  }
}

</mosaic_0001>

<llo_original>
// kernel: medium_network_forward.1
$region0: #{medium_network_forward.1}
  #allocation0 [shape = 'u32[]', space=smem, size = 0x4, offset = 0x4, fixed_abs, tag = 'smem constant byte address 0x4 - core index']
  #allocation1 [shape = 'u32[144,128]{1,0:T(1,128)}', space=vmem, size = 0x12000, scoped, tag = 'internal scratch']
  %s0 = inlined_call_operand.vmem [shape: f32[24,784], index: 0, kind: input, shape index: {}]
  %s1 = inlined_call_operand.hbm [shape: f32[784,256], index: 1, kind: input, shape index: {}]
  %s2 = inlined_call_operand.vmem [shape: f32[1,256], index: 2, kind: input, shape index: {}]
  %s3 = inlined_call_operand.vmem [shape: f32[256,128], index: 3, kind: input, shape index: {}]
  %s4 = inlined_call_operand.vmem [shape: f32[1,128], index: 4, kind: input, shape index: {}]
  %s5 = inlined_call_operand.vmem [shape: f32[128,128], index: 5, kind: input, shape index: {}]
  %s6 = inlined_call_operand.vmem [shape: f32[1,128], index: 6, kind: input, shape index: {}]
  %s7 = inlined_call_operand.vmem [shape: f32[24,128], index: 7, kind: output, shape index: {}]
  %s8 = sld [smem:[#allocation0]]
  $region42: #{medium_network_forward.1} parent=0
    _
  %s10 = ssub.s32 1, %s8
  %s11 = scalar_select 0, %s10, %s8
  $region1: #{medium_network_forward.1} parent=0
    #allocation2 [shape = 'u8[802816]{0}', space=vmem, size = 0xc4000, scoped, tag = 'input window, operand 1, single buffered']
    #allocation3 [shape = 's32[1]{0}', space=sflag, size = 0x4, scoped, tag = 'scoped memory for medium_network_forward.1']
    %12 = vsyncpa [#allocation3], 0
    // Predicated region
    $region2: #{medium_network_forward.1} parent=1 // pred_check
      _
    $region3: #{medium_network_forward.1} parent=1 // pred_check_branch
      %14 = sbr.rel (0) target = $region5
    $region4: #{medium_network_forward.1} parent=1 // pred_region
      _
    $region5: #{medium_network_forward.1} parent=1 // pred_fallthru
      _
    // Predicated region
    $region6: #{medium_network_forward.1} parent=1 // pred_check
      _
    $region7: #{medium_network_forward.1} parent=1 // pred_check_branch
      %16 = sbr.rel (0) target = $region9
    $region8: #{medium_network_forward.1} parent=1 // pred_region
      %s18 = ssub.s32 25088, 25088
      %19 = vsyncadd [#allocation3], %s18
      %s20 = sshll.u32 [#allocation2], 4
      %s21 = int_to_ptr.vmem [resolvable:$true] %s20
      %26 = dma.hbm_to_vmem [thread:$0]  %s1, 25088, %s21, [#allocation3], 256, 256, 16
    $region9: #{medium_network_forward.1} parent=1 // pred_fallthru
      _
    // Predicated region
    $region10: #{medium_network_forward.1} parent=1 // pred_check
      _
    $region11: #{medium_network_forward.1} parent=1 // pred_check_branch
      %28 = sbr.rel (0) target = $region13
    $region12: #{medium_network_forward.1} parent=1 // pred_region
      _
    $region13: #{medium_network_forward.1} parent=1 // pred_fallthru
      _
    // Predicated region
    $region14: #{medium_network_forward.1} parent=1 // pred_check
      _
    $region15: #{medium_network_forward.1} parent=1 // pred_check_branch
      %30 = sbr.rel (0) target = $region17
    $region16: #{medium_network_forward.1} parent=1 // pred_region
      _
    $region17: #{medium_network_forward.1} parent=1 // pred_fallthru
      _
    // Predicated region
    $region18: #{medium_network_forward.1} parent=1 // pred_check
      _
    $region19: #{medium_network_forward.1} parent=1 // pred_check_branch
      %32 = sbr.rel (0) target = $region21
    $region20: #{medium_network_forward.1} parent=1 // pred_region
      _
    $region21: #{medium_network_forward.1} parent=1 // pred_fallthru
      _
    // Predicated region
    $region22: #{medium_network_forward.1} parent=1 // pred_check
      _
    $region23: #{medium_network_forward.1} parent=1 // pred_check_branch
      %34 = sbr.rel (0) target = $region25
    $region24: #{medium_network_forward.1} parent=1 // pred_region
      _
    $region25: #{medium_network_forward.1} parent=1 // pred_fallthru
      _
    // Predicated region
    $region26: #{medium_network_forward.1} parent=1 // pred_check
      _
    $region27: #{medium_network_forward.1} parent=1 // pred_check_branch
      %36 = sbr.rel (0) target = $region29
    $region28: #{medium_network_forward.1} parent=1 // pred_region
      _
    $region29: #{medium_network_forward.1} parent=1 // pred_fallthru
      _
    // Predicated region
    $region30: #{medium_network_forward.1} parent=1 // pred_check
      _
    $region31: #{medium_network_forward.1} parent=1 // pred_check_branch
      %38 = sbr.rel (0) target = $region33
    $region32: #{medium_network_forward.1} parent=1 // pred_region
      %39 = dma.done [#allocation3], 25088
    $region33: #{medium_network_forward.1} parent=1 // pred_fallthru
      _
    %v40 = vld [vmem:[%s0] sm:$0xff]
    %v41 = vld [vmem:[%s0 + $0x8] sm:$0xff]
    %v42 = vld [vmem:[%s0 + $0x10] sm:$0xff]
    %v43 = vld [vmem:[%s0 + $0x18] sm:$0xff]
    %v44 = vld [vmem:[%s0 + $0x20] sm:$0xff]
    %v45 = vld [vmem:[%s0 + $0x28] sm:$0xff]
    %v46 = vld [vmem:[%s0 + $0x30] sm:$0xff]
    %v47 = vld [vmem:[%s0 + $0x38] sm:$0xff]
    %v48 = vld [vmem:[%s0 + $0x40] sm:$0xff]
    %v49 = vld [vmem:[%s0 + $0x48] sm:$0xff]
    %v50 = vld [vmem:[%s0 + $0x50] sm:$0xff]
    %v51 = vld [vmem:[%s0 + $0x58] sm:$0xff]
    %v52 = vld [vmem:[%s0 + $0x60] sm:$0xff]
    %v53 = vld [vmem:[%s0 + $0x68] sm:$0xff]
    %v54 = vld [vmem:[%s0 + $0x70] sm:$0xff]
    %v55 = vld [vmem:[%s0 + $0x78] sm:$0xff]
    %v56 = vld [vmem:[%s0 + $0x80] sm:$0xff]
    %v57 = vld [vmem:[%s0 + $0x88] sm:$0xff]
    %v58 = vld [vmem:[%s0 + $0x90] sm:$0xff]
    %v59 = vld [vmem:[%s0 + $0x98] sm:$0xff]
    %v60 = vld [vmem:[%s0 + $0xa0] sm:$0xff]
    %v61 = vld [vmem:[#allocation2] sm:$0xff]
    %v62 = vld [vmem:[#allocation2 + $0x8] sm:$0xff]
    %v63 = vld [vmem:[#allocation2 + $0x10] sm:$0xff]
    %v64 = vld [vmem:[#allocation2 + $0x18] sm:$0xff]
    %v65 = vld [vmem:[#allocation2 + $0x20] sm:$0xff]
    %v66 = vld [vmem:[#allocation2 + $0x28] sm:$0xff]
    %v67 = vld [vmem:[#allocation2 + $0x30] sm:$0xff]
    %v68 = vld [vmem:[#allocation2 + $0x38] sm:$0xff]
    %v69 = vld [vmem:[#allocation2 + $0x40] sm:$0xff]
    %v70 = vld [vmem:[#allocation2 + $0x48] sm:$0xff]
    %v71 = vld [vmem:[#allocation2 + $0x50] sm:$0xff]
    %v72 = vld [vmem:[#allocation2 + $0x58] sm:$0xff]
    %v73 = vld [vmem:[#allocation2 + $0x60] sm:$0xff]
    %v74 = vld [vmem:[#allocation2 + $0x68] sm:$0xff]
    %v75 = vld [vmem:[#allocation2 + $0x70] sm:$0xff]
    %v76 = vld [vmem:[#allocation2 + $0x78] sm:$0xff]
    %v77 = vld [vmem:[#allocation2 + $0x80] sm:$0xff]
    %v78 = vld [vmem:[#allocation2 + $0x88] sm:$0xff]
    %v79 = vld [vmem:[#allocation2 + $0x90] sm:$0xff]
    %v80 = vld [vmem:[#allocation2 + $0x98] sm:$0xff]
    %v81 = vld [vmem:[#allocation2 + $0xa0] sm:$0xff]
    %v82 = vld [vmem:[#allocation2 + $0xa8] sm:$0xff]
    %v83 = vld [vmem:[#allocation2 + $0xb0] sm:$0xff]
    %v84 = vld [vmem:[#allocation2 + $0xb8] sm:$0xff]
    %v85 = vld [vmem:[#allocation2 + $0xc0] sm:$0xff]
    %v86 = vld [vmem:[#allocation2 + $0xc8] sm:$0xff]
    %v87 = vld [vmem:[#allocation2 + $0xd0] sm:$0xff]
    %v88 = vld [vmem:[#allocation2 + $0xd8] sm:$0xff]
    %v89 = vld [vmem:[#allocation2 + $0xe0] sm:$0xff]
    %v90 = vld [vmem:[#allocation2 + $0xe8] sm:$0xff]
    %v91 = vld [vmem:[#allocation2 + $0xf0] sm:$0xff]
    %v92 = vld [vmem:[#allocation2 + $0xf8] sm:$0xff]
    %v93 = vld [vmem:[#allocation2 + $0x100] sm:$0xff]
    %v94 = vld [vmem:[#allocation2 + $0x108] sm:$0xff]
    %v95 = vld [vmem:[#allocation2 + $0x110] sm:$0xff]
    %v96 = vld [vmem:[#allocation2 + $0x118] sm:$0xff]
    %v97 = vld [vmem:[#allocation2 + $0x120] sm:$0xff]
    %v98 = vld [vmem:[#allocation2 + $0x128] sm:$0xff]
    %v99 = vld [vmem:[#allocation2 + $0x130] sm:$0xff]
    %v100 = vld [vmem:[#allocation2 + $0x138] sm:$0xff]
    %v101 = vld [vmem:[#allocation2 + $0x140] sm:$0xff]
    %v102 = vld [vmem:[#allocation2 + $0x148] sm:$0xff]
    %v103 = vld [vmem:[#allocation2 + $0x150] sm:$0xff]
    %v104 = vld [vmem:[#allocation2 + $0x158] sm:$0xff]
    %v105 = vld [vmem:[#allocation2 + $0x160] sm:$0xff]
    %v106 = vld [vmem:[#allocation2 + $0x168] sm:$0xff]
    %v107 = vld [vmem:[#allocation2 + $0x170] sm:$0xff]
    %v108 = vld [vmem:[#allocation2 + $0x178] sm:$0xff]
    %v109 = vld [vmem:[#allocation2 + $0x180] sm:$0xff]
    %v110 = vld [vmem:[#allocation2 + $0x188] sm:$0xff]
    %v111 = vld [vmem:[#allocation2 + $0x190] sm:$0xff]
    %v112 = vld [vmem:[#allocation2 + $0x198] sm:$0xff]
    %v113 = vld [vmem:[#allocation2 + $0x1a0] sm:$0xff]
    %v114 = vld [vmem:[#allocation2 + $0x1a8] sm:$0xff]
    %v115 = vld [vmem:[#allocation2 + $0x1b0] sm:$0xff]
    %v116 = vld [vmem:[#allocation2 + $0x1b8] sm:$0xff]
    %v117 = vld [vmem:[#allocation2 + $0x1c0] sm:$0xff]
    %v118 = vld [vmem:[#allocation2 + $0x1c8] sm:$0xff]
    %v119 = vld [vmem:[#allocation2 + $0x1d0] sm:$0xff]
    %v120 = vld [vmem:[#allocation2 + $0x1d8] sm:$0xff]
    %v121 = vld [vmem:[#allocation2 + $0x1e0] sm:$0xff]
    %v122 = vld [vmem:[#allocation2 + $0x1e8] sm:$0xff]
    %v123 = vld [vmem:[#allocation2 + $0x1f0] sm:$0xff]
    %v124 = vld [vmem:[#allocation2 + $0x1f8] sm:$0xff]
    %v125 = vld [vmem:[#allocation2 + $0x200] sm:$0xff]
    %v126 = vld [vmem:[#allocation2 + $0x208] sm:$0xff]
    %v127 = vld [vmem:[#allocation2 + $0x210] sm:$0xff]
    %v128 = vld [vmem:[#allocation2 + $0x218] sm:$0xff]
    %v129 = vld [vmem:[#allocation2 + $0x220] sm:$0xff]
    %v130 = vld [vmem:[#allocation2 + $0x228] sm:$0xff]
    %v131 = vld [vmem:[#allocation2 + $0x230] sm:$0xff]
    %v132 = vld [vmem:[#allocation2 + $0x238] sm:$0xff]
    %v133 = vld [vmem:[#allocation2 + $0x240] sm:$0xff]
    %v134 = vld [vmem:[#allocation2 + $0x248] sm:$0xff]
    %v135 = vld [vmem:[#allocation2 + $0x250] sm:$0xff]
    %v136 = vld [vmem:[#allocation2 + $0x258] sm:$0xff]
    %v137 = vld [vmem:[#allocation2 + $0x260] sm:$0xff]
    %v138 = vld [vmem:[#allocation2 + $0x268] sm:$0xff]
    %v139 = vld [vmem:[#allocation2 + $0x270] sm:$0xff]
    %v140 = vld [vmem:[#allocation2 + $0x278] sm:$0xff]
    %v141 = vld [vmem:[#allocation2 + $0x280] sm:$0xff]
    %v142 = vld [vmem:[#allocation2 + $0x288] sm:$0xff]
    %v143 = vld [vmem:[#allocation2 + $0x290] sm:$0xff]
    %v144 = vld [vmem:[#allocation2 + $0x298] sm:$0xff]
    %v145 = vld [vmem:[#allocation2 + $0x2a0] sm:$0xff]
    %v146 = vld [vmem:[#allocation2 + $0x2a8] sm:$0xff]
    %v147 = vld [vmem:[#allocation2 + $0x2b0] sm:$0xff]
    %v148 = vld [vmem:[#allocation2 + $0x2b8] sm:$0xff]
    %v149 = vld [vmem:[#allocation2 + $0x2c0] sm:$0xff]
    %v150 = vld [vmem:[#allocation2 + $0x2c8] sm:$0xff]
    %v151 = vld [vmem:[#allocation2 + $0x2d0] sm:$0xff]
    %v152 = vld [vmem:[#allocation2 + $0x2d8] sm:$0xff]
    %v153 = vld [vmem:[#allocation2 + $0x2e0] sm:$0xff]
    %v154 = vld [vmem:[#allocation2 + $0x2e8] sm:$0xff]
    %v155 = vld [vmem:[#allocation2 + $0x2f0] sm:$0xff]
    %v156 = vld [vmem:[#allocation2 + $0x2f8] sm:$0xff]
    %v157 = vld [vmem:[#allocation2 + $0x300] sm:$0xff]
    %v158 = vld [vmem:[#allocation2 + $0x308] sm:$0xff]
    %v159 = vld [vmem:[#allocation2 + $0x310] sm:$0xff]
    %v160 = vld [vmem:[#allocation2 + $0x318] sm:$0xff]
    %v161 = vld [vmem:[#allocation2 + $0x320] sm:$0xff]
    %v162 = vld [vmem:[#allocation2 + $0x328] sm:$0xff]
    %v163 = vld [vmem:[#allocation2 + $0x330] sm:$0xff]
    %v164 = vld [vmem:[#allocation2 + $0x338] sm:$0xff]
    %v165 = vld [vmem:[#allocation2 + $0x340] sm:$0xff]
    %v166 = vld [vmem:[#allocation2 + $0x348] sm:$0xff]
    %v167 = vld [vmem:[#allocation2 + $0x350] sm:$0xff]
    %v168 = vld [vmem:[#allocation2 + $0x358] sm:$0xff]
    %v169 = vld [vmem:[#allocation2 + $0x360] sm:$0xff]
    %v170 = vld [vmem:[#allocation2 + $0x368] sm:$0xff]
    %v171 = vld [vmem:[#allocation2 + $0x370] sm:$0xff]
    %v172 = vld [vmem:[#allocation2 + $0x378] sm:$0xff]
    %v173 = vld [vmem:[#allocation2 + $0x380] sm:$0xff]
    %v174 = vld [vmem:[#allocation2 + $0x388] sm:$0xff]
    %v175 = vld [vmem:[#allocation2 + $0x390] sm:$0xff]
    %v176 = vld [vmem:[#allocation2 + $0x398] sm:$0xff]
    %v177 = vld [vmem:[#allocation2 + $0x3a0] sm:$0xff]
    %v178 = vld [vmem:[#allocation2 + $0x3a8] sm:$0xff]
    %v179 = vld [vmem:[#allocation2 + $0x3b0] sm:$0xff]
    %v180 = vld [vmem:[#allocation2 + $0x3b8] sm:$0xff]
    %v181 = vld [vmem:[#allocation2 + $0x3c0] sm:$0xff]
    %v182 = vld [vmem:[#allocation2 + $0x3c8] sm:$0xff]
    %v183 = vld [vmem:[#allocation2 + $0x3d0] sm:$0xff]
    %v184 = vld [vmem:[#allocation2 + $0x3d8] sm:$0xff]
    %v185 = vld [vmem:[#allocation2 + $0x3e0] sm:$0xff]
    %v186 = vld [vmem:[#allocation2 + $0x3e8] sm:$0xff]
    %v187 = vld [vmem:[#allocation2 + $0x3f0] sm:$0xff]
    %v188 = vld [vmem:[#allocation2 + $0x3f8] sm:$0xff]
    %v189 = vld [vmem:[#allocation2 + $0x400] sm:$0xff]
    %v190 = vld [vmem:[#allocation2 + $0x408] sm:$0xff]
    %v191 = vld [vmem:[#allocation2 + $0x410] sm:$0xff]
    %v192 = vld [vmem:[#allocation2 + $0x418] sm:$0xff]
    %v193 = vld [vmem:[#allocation2 + $0x420] sm:$0xff]
    %v194 = vld [vmem:[#allocation2 + $0x428] sm:$0xff]
    %v195 = vld [vmem:[#allocation2 + $0x430] sm:$0xff]
    %v196 = vld [vmem:[#allocation2 + $0x438] sm:$0xff]
    %v197 = vld [vmem:[#allocation2 + $0x440] sm:$0xff]
    %v198 = vld [vmem:[#allocation2 + $0x448] sm:$0xff]
    %v199 = vld [vmem:[#allocation2 + $0x450] sm:$0xff]
    %v200 = vld [vmem:[#allocation2 + $0x458] sm:$0xff]
    %v201 = vld [vmem:[#allocation2 + $0x460] sm:$0xff]
    %v202 = vld [vmem:[#allocation2 + $0x468] sm:$0xff]
    %v203 = vld [vmem:[#allocation2 + $0x470] sm:$0xff]
    %v204 = vld [vmem:[#allocation2 + $0x478] sm:$0xff]
    %v205 = vld [vmem:[#allocation2 + $0x480] sm:$0xff]
    %v206 = vld [vmem:[#allocation2 + $0x488] sm:$0xff]
    %v207 = vld [vmem:[#allocation2 + $0x490] sm:$0xff]
    %v208 = vld [vmem:[#allocation2 + $0x498] sm:$0xff]
    %v209 = vld [vmem:[#allocation2 + $0x4a0] sm:$0xff]
    %v210 = vld [vmem:[#allocation2 + $0x4a8] sm:$0xff]
    %v211 = vld [vmem:[#allocation2 + $0x4b0] sm:$0xff]
    %v212 = vld [vmem:[#allocation2 + $0x4b8] sm:$0xff]
    %v213 = vld [vmem:[#allocation2 + $0x4c0] sm:$0xff]
    %v214 = vld [vmem:[#allocation2 + $0x4c8] sm:$0xff]
    %v215 = vld [vmem:[#allocation2 + $0x4d0] sm:$0xff]
    %v216 = vld [vmem:[#allocation2 + $0x4d8] sm:$0xff]
    %v217 = vld [vmem:[#allocation2 + $0x4e0] sm:$0xff]
    %v218 = vld [vmem:[#allocation2 + $0x4e8] sm:$0xff]
    %v219 = vld [vmem:[#allocation2 + $0x4f0] sm:$0xff]
    %v220 = vld [vmem:[#allocation2 + $0x4f8] sm:$0xff]
    %v221 = vld [vmem:[#allocation2 + $0x500] sm:$0xff]
    %v222 = vld [vmem:[#allocation2 + $0x508] sm:$0xff]
    %v223 = vld [vmem:[#allocation2 + $0x510] sm:$0xff]
    %v224 = vld [vmem:[#allocation2 + $0x518] sm:$0xff]
    %v225 = vld [vmem:[#allocation2 + $0x520] sm:$0xff]
    %v226 = vld [vmem:[#allocation2 + $0x528] sm:$0xff]
    %v227 = vld [vmem:[#allocation2 + $0x530] sm:$0xff]
    %v228 = vld [vmem:[#allocation2 + $0x538] sm:$0xff]
    %v229 = vld [vmem:[#allocation2 + $0x540] sm:$0xff]
    %v230 = vld [vmem:[#allocation2 + $0x548] sm:$0xff]
    %v231 = vld [vmem:[#allocation2 + $0x550] sm:$0xff]
    %v232 = vld [vmem:[#allocation2 + $0x558] sm:$0xff]
    %v233 = vld [vmem:[#allocation2 + $0x560] sm:$0xff]
    %v234 = vld [vmem:[#allocation2 + $0x568] sm:$0xff]
    %v235 = vld [vmem:[#allocation2 + $0x570] sm:$0xff]
    %v236 = vld [vmem:[#allocation2 + $0x578] sm:$0xff]
    %v237 = vld [vmem:[#allocation2 + $0x580] sm:$0xff]
    %v238 = vld [vmem:[#allocation2 + $0x588] sm:$0xff]
    %v239 = vld [vmem:[#allocation2 + $0x590] sm:$0xff]
    %v240 = vld [vmem:[#allocation2 + $0x598] sm:$0xff]
    %v241 = vld [vmem:[#allocation2 + $0x5a0] sm:$0xff]
    %v242 = vld [vmem:[#allocation2 + $0x5a8] sm:$0xff]
    %v243 = vld [vmem:[#allocation2 + $0x5b0] sm:$0xff]
    %v244 = vld [vmem:[#allocation2 + $0x5b8] sm:$0xff]
    %v245 = vld [vmem:[#allocation2 + $0x5c0] sm:$0xff]
    %v246 = vld [vmem:[#allocation2 + $0x5c8] sm:$0xff]
    %v247 = vld [vmem:[#allocation2 + $0x5d0] sm:$0xff]
    %v248 = vld [vmem:[#allocation2 + $0x5d8] sm:$0xff]
    %v249 = vld [vmem:[#allocation2 + $0x5e0] sm:$0xff]
    %v250 = vld [vmem:[#allocation2 + $0x5e8] sm:$0xff]
    %v251 = vld [vmem:[#allocation2 + $0x5f0] sm:$0xff]
    %v252 = vld [vmem:[#allocation2 + $0x5f8] sm:$0xff]
    %v253 = vld [vmem:[#allocation2 + $0x600] sm:$0xff]
    %v254 = vld [vmem:[#allocation2 + $0x608] sm:$0xff]
    %v255 = vld [vmem:[#allocation2 + $0x610] sm:$0xff]
    %v256 = vld [vmem:[#allocation2 + $0x618] sm:$0xff]
    %v257 = vld [vmem:[%s2] sm:$0x3]
    %v259 = vlaneseq
    %v260 = vshrl.u32 %v259, 7
    %v261 = vsub.s32 0, %v260
    %v262 = vrot.slane %v257, %v261
    %v263 = vlaneseq
    %v264 = vshrl.u32 %v263, 7
    %v265 = vsub.s32 1, %v264
    %v266 = vrot.slane %v257, %v265
    %vm269 = vcmask 130048
    %v271 = vsel %vm269, %v46, 0
    %v274 = vsel %vm269, %v53, 0
    %v277 = vsel %vm269, %v60, 0
    %279 = vmatprep.subr.mxu0 %v62
    %280 = vmatpush1.msra.mxu0 %v61
    %281 = vmatprep.subr.mxu0 %v64
    %282 = vmatpush1.msra.mxu0 %v63
    %283 = vmatprep.subr.mxu0 %v66
    %284 = vmatpush1.msra.mxu0 %v65
    %285 = vmatprep.subr.mxu0 %v68
    %286 = vmatpush1.msra.mxu0 %v67
    %287 = vmatprep.subr.mxu0 %v70
    %288 = vmatpush1.msra.mxu0 %v69
    %289 = vmatprep.subr.mxu0 %v72
    %290 = vmatpush1.msra.mxu0 %v71
    %291 = vmatprep.subr.mxu0 %v74
    %292 = vmatpush1.msra.mxu0 %v73
    %293 = vmatprep.subr.mxu0 %v76
    %294 = vmatpush1.msra.mxu0 %v75
    %295 = vmatprep.subr.mxu0 %v78
    %296 = vmatpush1.msra.mxu0 %v77
    %297 = vmatprep.subr.mxu0 %v80
    %298 = vmatpush1.msra.mxu0 %v79
    %299 = vmatprep.subr.mxu0 %v82
    %300 = vmatpush1.msra.mxu0 %v81
    %301 = vmatprep.subr.mxu0 %v84
    %302 = vmatpush1.msra.mxu0 %v83
    %303 = vmatprep.subr.mxu0 %v86
    %304 = vmatpush1.msra.mxu0 %v85
    %305 = vmatprep.subr.mxu0 %v88
    %306 = vmatpush1.msra.mxu0 %v87
    %307 = vmatprep.subr.mxu0 %v90
    %308 = vmatpush1.msra.mxu0 %v89
    %309 = vmatprep.subr.mxu0 %v92
    %310 = vmatpush1.msra.mxu0 %v91
    %311 = vmatprep.subr.mxu0 %v94
    %312 = vmatpush1.msra.mxu0 %v93
    %313 = vmatprep.subr.mxu0 %v96
    %314 = vmatpush1.msra.mxu0 %v95
    %315 = vmatprep.subr.mxu0 %v98
    %316 = vmatpush1.msra.mxu0 %v97
    %317 = vmatprep.subr.mxu0 %v100
    %318 = vmatpush1.msra.mxu0 %v99
    %319 = vmatprep.subr.mxu0 %v102
    %320 = vmatpush1.msra.mxu0 %v101
    %321 = vmatprep.subr.mxu0 %v104
    %322 = vmatpush1.msra.mxu0 %v103
    %323 = vmatprep.subr.mxu0 %v106
    %324 = vmatpush1.msra.mxu0 %v105
    %325 = vmatprep.subr.mxu0 %v108
    %326 = vmatpush1.msra.mxu0 %v107
    %327 = vmatprep.subr.mxu0 %v110
    %328 = vmatpush1.msra.mxu0 %v109
    %329 = vmatprep.subr.mxu0 %v112
    %330 = vmatpush1.msra.mxu0 %v111
    %331 = vmatprep.subr.mxu0 %v114
    %332 = vmatpush1.msra.mxu0 %v113
    %333 = vmatprep.subr.mxu0 %v116
    %334 = vmatpush1.msra.mxu0 %v115
    %335 = vmatprep.subr.mxu0 %v118
    %336 = vmatpush1.msra.mxu0 %v117
    %337 = vmatprep.subr.mxu0 %v120
    %338 = vmatpush1.msra.mxu0 %v119
    %339 = vmatprep.subr.mxu0 %v122
    %340 = vmatpush1.msra.mxu0 %v121
    %341 = vmatprep.subr.mxu0 %v124
    %342 = vmatpush1.msra.mxu0 %v123
    %343 = vmatprep.mubr.f32.mxu0 %v41
    %344 = vmatmul.mubr.f32.gmra.mrb[0].mxu0 %v40
    %v345 = vpop.f32.mrb[0].mxu0
    %v346 = vadd.f32 %v262, %v345
    %v347 = vpop.f32.mrb[0].mxu0
    %v348 = vadd.f32 %v266, %v347
    %349 = vmatprep.mubr.f32.mxu0 %v48
    %350 = vmatmul.mubr.f32.gmra.mrb[0].mxu0 %v47
    %v351 = vpop.f32.mrb[0].mxu0
    %v352 = vadd.f32 %v262, %v351
    %v353 = vpop.f32.mrb[0].mxu0
    %v354 = vadd.f32 %v266, %v353
    %355 = vmatprep.mubr.f32.mxu0 %v55
    %356 = vmatmul.mubr.f32.gmra.mrb[0].mxu0 %v54
    %v357 = vpop.f32.mrb[0].mxu0
    %v358 = vadd.f32 %v262, %v357
    %v359 = vpop.f32.mrb[0].mxu0
    %v360 = vadd.f32 %v266, %v359
    %361 = vdwg.mxu0
    %362 = vmatprep.subr.mxu0 %v126
    %363 = vmatpush1.msra.mxu0 %v125
    %364 = vmatprep.subr.mxu0 %v128
    %365 = vmatpush1.msra.mxu0 %v127
    %366 = vmatprep.subr.mxu0 %v130
    %367 = vmatpush1.msra.mxu0 %v129
    %368 = vmatprep.subr.mxu0 %v132
    %369 = vmatpush1.msra.mxu0 %v131
    %370 = vmatprep.subr.mxu0 %v134
    %371 = vmatpush1.msra.mxu0 %v133
    %372 = vmatprep.subr.mxu0 %v136
    %373 = vmatpush1.msra.mxu0 %v135
    %374 = vmatprep.subr.mxu0 %v138
    %375 = vmatpush1.msra.mxu0 %v137
    %376 = vmatprep.subr.mxu0 %v140
    %377 = vmatpush1.msra.mxu0 %v139
    %378 = vmatprep.subr.mxu0 %v142
    %379 = vmatpush1.msra.mxu0 %v141
    %380 = vmatprep.subr.mxu0 %v144
    %381 = vmatpush1.msra.mxu0 %v143
    %382 = vmatprep.subr.mxu0 %v146
    %383 = vmatpush1.msra.mxu0 %v145
    %384 = vmatprep.subr.mxu0 %v148
    %385 = vmatpush1.msra.mxu0 %v147
    %386 = vmatprep.subr.mxu0 %v150
    %387 = vmatpush1.msra.mxu0 %v149
    %388 = vmatprep.subr.mxu0 %v152
    %389 = vmatpush1.msra.mxu0 %v151
    %390 = vmatprep.subr.mxu0 %v154
    %391 = vmatpush1.msra.mxu0 %v153
    %392 = vmatprep.subr.mxu0 %v156
    %393 = vmatpush1.msra.mxu0 %v155
    %394 = vmatprep.subr.mxu0 %v158
    %395 = vmatpush1.msra.mxu0 %v157
    %396 = vmatprep.subr.mxu0 %v160
    %397 = vmatpush1.msra.mxu0 %v159
    %398 = vmatprep.subr.mxu0 %v162
    %399 = vmatpush1.msra.mxu0 %v161
    %400 = vmatprep.subr.mxu0 %v164
    %401 = vmatpush1.msra.mxu0 %v163
    %402 = vmatprep.subr.mxu0 %v166
    %403 = vmatpush1.msra.mxu0 %v165
    %404 = vmatprep.subr.mxu0 %v168
    %405 = vmatpush1.msra.mxu0 %v167
    %406 = vmatprep.subr.mxu0 %v170
    %407 = vmatpush1.msra.mxu0 %v169
    %408 = vmatprep.subr.mxu0 %v172
    %409 = vmatpush1.msra.mxu0 %v171
    %410 = vmatprep.subr.mxu0 %v174
    %411 = vmatpush1.msra.mxu0 %v173
    %412 = vmatprep.subr.mxu0 %v176
    %413 = vmatpush1.msra.mxu0 %v175
    %414 = vmatprep.subr.mxu0 %v178
    %415 = vmatpush1.msra.mxu0 %v177
    %416 = vmatprep.subr.mxu0 %v180
    %417 = vmatpush1.msra.mxu0 %v179
    %418 = vmatprep.subr.mxu0 %v182
    %419 = vmatpush1.msra.mxu0 %v181
    %420 = vmatprep.subr.mxu0 %v184
    %421 = vmatpush1.msra.mxu0 %v183
    %422 = vmatprep.subr.mxu0 %v186
    %423 = vmatpush1.msra.mxu0 %v185
    %424 = vmatprep.subr.mxu0 %v188
    %425 = vmatpush1.msra.mxu0 %v187
    %426 = vmatprep.mubr.f32.mxu0 %v43
    %427 = vmatmul.mubr.f32.gmra.mrb[0].mxu0 %v42
    %v428 = vpop.f32.mrb[0].mxu0
    %v429 = vadd.f32 %v346, %v428
    %v430 = vpop.f32.mrb[0].mxu0
    %v431 = vadd.f32 %v348, %v430
    %432 = vmatprep.mubr.f32.mxu0 %v50
    %433 = vmatmul.mubr.f32.gmra.mrb[0].mxu0 %v49
    %v434 = vpop.f32.mrb[0].mxu0
    %v435 = vadd.f32 %v352, %v434
    %v436 = vpop.f32.mrb[0].mxu0
    %v437 = vadd.f32 %v354, %v436
    %438 = vmatprep.mubr.f32.mxu0 %v57
    %439 = vmatmul.mubr.f32.gmra.mrb[0].mxu0 %v56
    %v440 = vpop.f32.mrb[0].mxu0
    %v441 = vadd.f32 %v358, %v440
    %v442 = vpop.f32.mrb[0].mxu0
    %v443 = vadd.f32 %v360, %v442
    %444 = vdwg.mxu0
    %445 = vmatprep.subr.mxu0 %v190
    %446 = vmatpush1.msra.mxu0 %v189
    %447 = vmatprep.subr.mxu0 %v192
    %448 = vmatpush1.msra.mxu0 %v191
    %449 = vmatprep.subr.mxu0 %v194
    %450 = vmatpush1.msra.mxu0 %v193
    %451 = vmatprep.subr.mxu0 %v196
    %452 = vmatpush1.msra.mxu0 %v195
    %453 = vmatprep.subr.mxu0 %v198
    %454 = vmatpush1.msra.mxu0 %v197
    %455 = vmatprep.subr.mxu0 %v200
    %456 = vmatpush1.msra.mxu0 %v199
    %457 = vmatprep.subr.mxu0 %v202
    %458 = vmatpush1.msra.mxu0 %v201
    %459 = vmatprep.subr.mxu0 %v204
    %460 = vmatpush1.msra.mxu0 %v203
    %461 = vmatprep.subr.mxu0 %v206
    %462 = vmatpush1.msra.mxu0 %v205
    %463 = vmatprep.subr.mxu0 %v208
    %464 = vmatpush1.msra.mxu0 %v207
    %465 = vmatprep.subr.mxu0 %v210
    %466 = vmatpush1.msra.mxu0 %v209
    %467 = vmatprep.subr.mxu0 %v212
    %468 = vmatpush1.msra.mxu0 %v211
    %469 = vmatprep.subr.mxu0 %v214
    %470 = vmatpush1.msra.mxu0 %v213
    %471 = vmatprep.subr.mxu0 %v216
    %472 = vmatpush1.msra.mxu0 %v215
    %473 = vmatprep.subr.mxu0 %v218
    %474 = vmatpush1.msra.mxu0 %v217
    %475 = vmatprep.subr.mxu0 %v220
    %476 = vmatpush1.msra.mxu0 %v219
    %477 = vmatprep.subr.mxu0 %v222
    %478 = vmatpush1.msra.mxu0 %v221
    %479 = vmatprep.subr.mxu0 %v224
    %480 = vmatpush1.msra.mxu0 %v223
    %481 = vmatprep.subr.mxu0 %v226
    %482 = vmatpush1.msra.mxu0 %v225
    %483 = vmatprep.subr.mxu0 %v228
    %484 = vmatpush1.msra.mxu0 %v227
    %485 = vmatprep.subr.mxu0 %v230
    %486 = vmatpush1.msra.mxu0 %v229
    %487 = vmatprep.subr.mxu0 %v232
    %488 = vmatpush1.msra.mxu0 %v231
    %489 = vmatprep.subr.mxu0 %v234
    %490 = vmatpush1.msra.mxu0 %v233
    %491 = vmatprep.subr.mxu0 %v236
    %492 = vmatpush1.msra.mxu0 %v235
    %493 = vmatprep.subr.mxu0 %v238
    %494 = vmatpush1.msra.mxu0 %v237
    %495 = vmatprep.subr.mxu0 %v240
    %496 = vmatpush1.msra.mxu0 %v239
    %497 = vmatprep.subr.mxu0 %v242
    %498 = vmatpush1.msra.mxu0 %v241
    %499 = vmatprep.subr.mxu0 %v244
    %500 = vmatpush1.msra.mxu0 %v243
    %501 = vmatprep.subr.mxu0 %v246
    %502 = vmatpush1.msra.mxu0 %v245
    %503 = vmatprep.subr.mxu0 %v248
    %504 = vmatpush1.msra.mxu0 %v247
    %505 = vmatprep.subr.mxu0 %v250
    %506 = vmatpush1.msra.mxu0 %v249
    %507 = vmatprep.subr.mxu0 %v252
    %508 = vmatpush1.msra.mxu0 %v251
    %509 = vmatprep.mubr.f32.mxu0 %v45
    %510 = vmatmul.mubr.f32.gmra.mrb[0].mxu0 %v44
    %v511 = vpop.f32.mrb[0].mxu0
    %v512 = vadd.f32 %v429, %v511
    %v513 = vpop.f32.mrb[0].mxu0
    %v514 = vadd.f32 %v431, %v513
    %515 = vmatprep.mubr.f32.mxu0 %v52
    %516 = vmatmul.mubr.f32.gmra.mrb[0].mxu0 %v51
    %v517 = vpop.f32.mrb[0].mxu0
    %v518 = vadd.f32 %v435, %v517
    %v519 = vpop.f32.mrb[0].mxu0
    %v520 = vadd.f32 %v437, %v519
    %521 = vmatprep.mubr.f32.mxu0 %v59
    %522 = vmatmul.mubr.f32.gmra.mrb[0].mxu0 %v58
    %v523 = vpop.f32.mrb[0].mxu0
    %v524 = vadd.f32 %v441, %v523
    %v525 = vpop.f32.mrb[0].mxu0
    %v526 = vadd.f32 %v443, %v525
    %527 = vdwg.mxu0
    %528 = vmatprep.subr.mxu0 %v254
    %529 = vmatpush1.msra.mxu0 %v253
    %530 = vmatprep.subr.mxu0 %v256
    %531 = vmatpush1.msra.mxu0 %v255
    %532 = vmatprep.subr.mxu0 0.0
    %533 = vmatpush1.msra.mxu0 0.0
    %534 = vmatprep.subr.mxu0 0.0
    %535 = vmatpush1.msra.mxu0 0.0
    %536 = vmatprep.subr.mxu0 0.0
    %537 = vmatpush1.msra.mxu0 0.0
    %538 = vmatprep.subr.mxu0 0.0
    %539 = vmatpush1.msra.mxu0 0.0
    %540 = vmatprep.subr.mxu0 0.0
    %541 = vmatpush1.msra.mxu0 0.0
    %542 = vmatprep.subr.mxu0 0.0
    %543 = vmatpush1.msra.mxu0 0.0
    %544 = vmatprep.subr.mxu0 0.0
    %545 = vmatpush1.msra.mxu0 0.0
    %546 = vmatprep.subr.mxu0 0.0
    %547 = vmatpush1.msra.mxu0 0.0
    %548 = vmatprep.subr.mxu0 0.0
    %549 = vmatpush1.msra.mxu0 0.0
    %550 = vmatprep.subr.mxu0 0.0
    %551 = vmatpush1.msra.mxu0 0.0
    %552 = vmatprep.subr.mxu0 0.0
    %553 = vmatpush1.msra.mxu0 0.0
    %554 = vmatprep.subr.mxu0 0.0
    %555 = vmatpush1.msra.mxu0 0.0
    %556 = vmatprep.subr.mxu0 0.0
    %557 = vmatpush1.msra.mxu0 0.0
    %558 = vmatprep.subr.mxu0 0.0
    %559 = vmatpush1.msra.mxu0 0.0
    %560 = vmatprep.subr.mxu0 0.0
    %561 = vmatpush1.msra.mxu0 0.0
    %562 = vmatprep.subr.mxu0 0.0
    %563 = vmatpush1.msra.mxu0 0.0
    %564 = vmatprep.subr.mxu0 0.0
    %565 = vmatpush1.msra.mxu0 0.0
    %566 = vmatprep.subr.mxu0 0.0
    %567 = vmatpush1.msra.mxu0 0.0
    %568 = vmatprep.subr.mxu0 0.0
    %569 = vmatpush1.msra.mxu0 0.0
    %570 = vmatprep.subr.mxu0 0.0
    %571 = vmatpush1.msra.mxu0 0.0
    %572 = vmatprep.subr.mxu0 0.0
    %573 = vmatpush1.msra.mxu0 0.0
    %574 = vmatprep.subr.mxu0 0.0
    %575 = vmatpush1.msra.mxu0 0.0
    %576 = vmatprep.subr.mxu0 0.0
    %577 = vmatpush1.msra.mxu0 0.0
    %578 = vmatprep.subr.mxu0 0.0
    %579 = vmatpush1.msra.mxu0 0.0
    %580 = vmatprep.subr.mxu0 0.0
    %581 = vmatpush1.msra.mxu0 0.0
    %582 = vmatprep.subr.mxu0 0.0
    %583 = vmatpush1.msra.mxu0 0.0
    %584 = vmatprep.subr.mxu0 0.0
    %585 = vmatpush1.msra.mxu0 0.0
    %586 = vmatprep.subr.mxu0 0.0
    %587 = vmatpush1.msra.mxu0 0.0
    %588 = vmatprep.subr.mxu0 0.0
    %589 = vmatpush1.msra.mxu0 0.0
    %590 = vmatprep.subr.mxu0 0.0
    %591 = vmatpush1.msra.mxu0 0.0
    %592 = vmatprep.mubr.f32.mxu0 0.0
    %593 = vmatmul.mubr.f32.gmra.mrb[0].mxu0 %v271
    %v594 = vpop.f32.mrb[0].mxu0
    %v595 = vadd.f32 %v512, %v594
    %v596 = vpop.f32.mrb[0].mxu0
    %v597 = vadd.f32 %v514, %v596
    %598 = vmatprep.mubr.f32.mxu0 0.0
    %599 = vmatmul.mubr.f32.gmra.mrb[0].mxu0 %v274
    %v600 = vpop.f32.mrb[0].mxu0
    %v601 = vadd.f32 %v518, %v600
    %v602 = vpop.f32.mrb[0].mxu0
    %v603 = vadd.f32 %v520, %v602
    %604 = vmatprep.mubr.f32.mxu0 0.0
    %605 = vmatmul.mubr.f32.gmra.mrb[0].mxu0 %v277
    %v606 = vpop.f32.mrb[0].mxu0
    %v607 = vadd.f32 %v524, %v606
    %v608 = vpop.f32.mrb[0].mxu0
    %v609 = vadd.f32 %v526, %v608
    %610 = vdwg.mxu0
    %v611 = vmul.f32 %v595, 0.5
    %v612 = vmul.f32 %v597, 0.5
    %v613 = vmul.f32 %v601, 0.5
    %v614 = vmul.f32 %v603, 0.5
    %v615 = vmul.f32 %v607, 0.5
    %v616 = vmul.f32 %v609, 0.5
    %v617 = vrcp.pop 1.4142135
    %v618 = vmul.f32 %v595, %v617
    %v619 = vmul.f32 %v597, %v617
    %v620 = vmul.f32 %v601, %v617
    %v621 = vmul.f32 %v603, %v617
    %v622 = vmul.f32 %v607, %v617
    %v623 = vmul.f32 %v609, %v617
    %v624 = verf.f32.pop %v618
    %v625 = verf.f32.pop %v619
    %v626 = verf.f32.pop %v620
    %v627 = verf.f32.pop %v621
    %v628 = verf.f32.pop %v622
    %v629 = verf.f32.pop %v623
    %v630 = vadd.f32 %v624, 1.0
    %v631 = vadd.f32 %v625, 1.0
    %v632 = vadd.f32 %v626, 1.0
    %v633 = vadd.f32 %v627, 1.0
    %v634 = vadd.f32 %v628, 1.0
    %v635 = vadd.f32 %v629, 1.0
    %v636 = vmul.f32 %v611, %v630
    %v637 = vmul.f32 %v612, %v631
    %v638 = vmul.f32 %v613, %v632
    %v639 = vmul.f32 %v614, %v633
    %v640 = vmul.f32 %v615, %v634
    %v641 = vmul.f32 %v616, %v635
    %v642 = vld [vmem:[%s3] sm:$0xff]
    %v643 = vld [vmem:[%s3 + $0x8] sm:$0xff]
    %v644 = vld [vmem:[%s3 + $0x10] sm:$0xff]
    %v645 = vld [vmem:[%s3 + $0x18] sm:$0xff]
    %v646 = vld [vmem:[%s3 + $0x20] sm:$0xff]
    %v647 = vld [vmem:[%s3 + $0x28] sm:$0xff]
    %v648 = vld [vmem:[%s3 + $0x30] sm:$0xff]
    %v649 = vld [vmem:[%s3 + $0x38] sm:$0xff]
    %v650 = vld [vmem:[%s3 + $0x40] sm:$0xff]
    %v651 = vld [vmem:[%s3 + $0x48] sm:$0xff]
    %v652 = vld [vmem:[%s3 + $0x50] sm:$0xff]
    %v653 = vld [vmem:[%s3 + $0x58] sm:$0xff]
    %v654 = vld [vmem:[%s3 + $0x60] sm:$0xff]
    %v655 = vld [vmem:[%s3 + $0x68] sm:$0xff]
    %v656 = vld [vmem:[%s3 + $0x70] sm:$0xff]
    %v657 = vld [vmem:[%s3 + $0x78] sm:$0xff]
    %v658 = vld [vmem:[%s3 + $0x80] sm:$0xff]
    %v659 = vld [vmem:[%s3 + $0x88] sm:$0xff]
    %v660 = vld [vmem:[%s3 + $0x90] sm:$0xff]
    %v661 = vld [vmem:[%s3 + $0x98] sm:$0xff]
    %v662 = vld [vmem:[%s3 + $0xa0] sm:$0xff]
    %v663 = vld [vmem:[%s3 + $0xa8] sm:$0xff]
    %v664 = vld [vmem:[%s3 + $0xb0] sm:$0xff]
    %v665 = vld [vmem:[%s3 + $0xb8] sm:$0xff]
    %v666 = vld [vmem:[%s3 + $0xc0] sm:$0xff]
    %v667 = vld [vmem:[%s3 + $0xc8] sm:$0xff]
    %v668 = vld [vmem:[%s3 + $0xd0] sm:$0xff]
    %v669 = vld [vmem:[%s3 + $0xd8] sm:$0xff]
    %v670 = vld [vmem:[%s3 + $0xe0] sm:$0xff]
    %v671 = vld [vmem:[%s3 + $0xe8] sm:$0xff]
    %v672 = vld [vmem:[%s3 + $0xf0] sm:$0xff]
    %v673 = vld [vmem:[%s3 + $0xf8] sm:$0xff]
    %v674 = vld [vmem:[%s4] sm:$0x1]
    %v676 = vlaneseq
    %v677 = vshrl.u32 %v676, 7
    %v678 = vsub.s32 0, %v677
    %v679 = vrot.slane %v674, %v678
    %681 = vmatprep.subr.mxu0 0.0
    %682 = vmatpush1.msra.mxu0 %v642
    %683 = vmatprep.subr.mxu0 0.0
    %684 = vmatpush1.msra.mxu0 %v643
    %685 = vmatprep.subr.mxu0 0.0
    %686 = vmatpush1.msra.mxu0 %v644
    %687 = vmatprep.subr.mxu0 0.0
    %688 = vmatpush1.msra.mxu0 %v645
    %689 = vmatprep.subr.mxu0 0.0
    %690 = vmatpush1.msra.mxu0 %v646
    %691 = vmatprep.subr.mxu0 0.0
    %692 = vmatpush1.msra.mxu0 %v647
    %693 = vmatprep.subr.mxu0 0.0
    %694 = vmatpush1.msra.mxu0 %v648
    %695 = vmatprep.subr.mxu0 0.0
    %696 = vmatpush1.msra.mxu0 %v649
    %697 = vmatprep.subr.mxu0 0.0
    %698 = vmatpush1.msra.mxu0 %v650
    %699 = vmatprep.subr.mxu0 0.0
    %700 = vmatpush1.msra.mxu0 %v651
    %701 = vmatprep.subr.mxu0 0.0
    %702 = vmatpush1.msra.mxu0 %v652
    %703 = vmatprep.subr.mxu0 0.0
    %704 = vmatpush1.msra.mxu0 %v653
    %705 = vmatprep.subr.mxu0 0.0
    %706 = vmatpush1.msra.mxu0 %v654
    %707 = vmatprep.subr.mxu0 0.0
    %708 = vmatpush1.msra.mxu0 %v655
    %709 = vmatprep.subr.mxu0 0.0
    %710 = vmatpush1.msra.mxu0 %v656
    %711 = vmatprep.subr.mxu0 0.0
    %712 = vmatpush1.msra.mxu0 %v657
    %713 = vmatprep.subr.mxu0 0.0
    %714 = vmatpush1.msra.mxu0 %v658
    %715 = vmatprep.subr.mxu0 0.0
    %716 = vmatpush1.msra.mxu0 %v659
    %717 = vmatprep.subr.mxu0 0.0
    %718 = vmatpush1.msra.mxu0 %v660
    %719 = vmatprep.subr.mxu0 0.0
    %720 = vmatpush1.msra.mxu0 %v661
    %721 = vmatprep.subr.mxu0 0.0
    %722 = vmatpush1.msra.mxu0 %v662
    %723 = vmatprep.subr.mxu0 0.0
    %724 = vmatpush1.msra.mxu0 %v663
    %725 = vmatprep.subr.mxu0 0.0
    %726 = vmatpush1.msra.mxu0 %v664
    %727 = vmatprep.subr.mxu0 0.0
    %728 = vmatpush1.msra.mxu0 %v665
    %729 = vmatprep.subr.mxu0 0.0
    %730 = vmatpush1.msra.mxu0 %v666
    %731 = vmatprep.subr.mxu0 0.0
    %732 = vmatpush1.msra.mxu0 %v667
    %733 = vmatprep.subr.mxu0 0.0
    %734 = vmatpush1.msra.mxu0 %v668
    %735 = vmatprep.subr.mxu0 0.0
    %736 = vmatpush1.msra.mxu0 %v669
    %737 = vmatprep.subr.mxu0 0.0
    %738 = vmatpush1.msra.mxu0 %v670
    %739 = vmatprep.subr.mxu0 0.0
    %740 = vmatpush1.msra.mxu0 %v671
    %741 = vmatprep.subr.mxu0 0.0
    %742 = vmatpush1.msra.mxu0 %v672
    %743 = vmatprep.subr.mxu0 0.0
    %744 = vmatpush1.msra.mxu0 %v673
    %745 = vmatprep.mubr.f32.mxu0 %v637
    %746 = vmatmul.mubr.f32.gmra.mrb[0].mxu0 %v636
    %v747 = vpop.f32.mrb[0].mxu0
    %v748 = vadd.f32 %v679, %v747
    %v749 = vpop.f32.mrb[0].mxu0
    %750 = vmatprep.mubr.f32.mxu0 %v639
    %751 = vmatmul.mubr.f32.gmra.mrb[0].mxu0 %v638
    %v752 = vpop.f32.mrb[0].mxu0
    %v753 = vadd.f32 %v679, %v752
    %v754 = vpop.f32.mrb[0].mxu0
    %755 = vmatprep.mubr.f32.mxu0 %v641
    %756 = vmatmul.mubr.f32.gmra.mrb[0].mxu0 %v640
    %v757 = vpop.f32.mrb[0].mxu0
    %v758 = vadd.f32 %v679, %v757
    %v759 = vpop.f32.mrb[0].mxu0
    %760 = vdwg.mxu0
    %v761 = vmul.f32 %v748, 0.5
    %v762 = vmul.f32 %v753, 0.5
    %v763 = vmul.f32 %v758, 0.5
    %v764 = vmul.f32 %v748, %v617
    %v765 = vmul.f32 %v753, %v617
    %v766 = vmul.f32 %v758, %v617
    %v767 = verf.f32.pop %v764
    %v768 = verf.f32.pop %v765
    %v769 = verf.f32.pop %v766
    %v770 = vadd.f32 %v767, 1.0
    %v771 = vadd.f32 %v768, 1.0
    %v772 = vadd.f32 %v769, 1.0
    %v773 = vmul.f32 %v761, %v770
    %v774 = vmul.f32 %v762, %v771
    %v775 = vmul.f32 %v763, %v772
    %v776 = vld [vmem:[%s5] sm:$0xff]
    %v777 = vld [vmem:[%s5 + $0x8] sm:$0xff]
    %v778 = vld [vmem:[%s5 + $0x10] sm:$0xff]
    %v779 = vld [vmem:[%s5 + $0x18] sm:$0xff]
    %v780 = vld [vmem:[%s5 + $0x20] sm:$0xff]
    %v781 = vld [vmem:[%s5 + $0x28] sm:$0xff]
    %v782 = vld [vmem:[%s5 + $0x30] sm:$0xff]
    %v783 = vld [vmem:[%s5 + $0x38] sm:$0xff]
    %v784 = vld [vmem:[%s5 + $0x40] sm:$0xff]
    %v785 = vld [vmem:[%s5 + $0x48] sm:$0xff]
    %v786 = vld [vmem:[%s5 + $0x50] sm:$0xff]
    %v787 = vld [vmem:[%s5 + $0x58] sm:$0xff]
    %v788 = vld [vmem:[%s5 + $0x60] sm:$0xff]
    %v789 = vld [vmem:[%s5 + $0x68] sm:$0xff]
    %v790 = vld [vmem:[%s5 + $0x70] sm:$0xff]
    %v791 = vld [vmem:[%s5 + $0x78] sm:$0xff]
    %v792 = vld [vmem:[%s6] sm:$0x1]
    %v794 = vlaneseq
    %v795 = vshrl.u32 %v794, 7
    %v796 = vsub.s32 0, %v795
    %v797 = vrot.slane %v792, %v796
    %799 = vmatprep.subr.mxu0 0.0
    %800 = vmatpush1.msra.mxu0 %v776
    %801 = vmatprep.subr.mxu0 0.0
    %802 = vmatpush1.msra.mxu0 %v777
    %803 = vmatprep.subr.mxu0 0.0
    %804 = vmatpush1.msra.mxu0 %v778
    %805 = vmatprep.subr.mxu0 0.0
    %806 = vmatpush1.msra.mxu0 %v779
    %807 = vmatprep.subr.mxu0 0.0
    %808 = vmatpush1.msra.mxu0 %v780
    %809 = vmatprep.subr.mxu0 0.0
    %810 = vmatpush1.msra.mxu0 %v781
    %811 = vmatprep.subr.mxu0 0.0
    %812 = vmatpush1.msra.mxu0 %v782
    %813 = vmatprep.subr.mxu0 0.0
    %814 = vmatpush1.msra.mxu0 %v783
    %815 = vmatprep.subr.mxu0 0.0
    %816 = vmatpush1.msra.mxu0 %v784
    %817 = vmatprep.subr.mxu0 0.0
    %818 = vmatpush1.msra.mxu0 %v785
    %819 = vmatprep.subr.mxu0 0.0
    %820 = vmatpush1.msra.mxu0 %v786
    %821 = vmatprep.subr.mxu0 0.0
    %822 = vmatpush1.msra.mxu0 %v787
    %823 = vmatprep.subr.mxu0 0.0
    %824 = vmatpush1.msra.mxu0 %v788
    %825 = vmatprep.subr.mxu0 0.0
    %826 = vmatpush1.msra.mxu0 %v789
    %827 = vmatprep.subr.mxu0 0.0
    %828 = vmatpush1.msra.mxu0 %v790
    %829 = vmatprep.subr.mxu0 0.0
    %830 = vmatpush1.msra.mxu0 %v791
    %831 = vmatprep.subr.mxu0 0.0
    %832 = vmatpush1.msra.mxu0 0.0
    %833 = vmatprep.subr.mxu0 0.0
    %834 = vmatpush1.msra.mxu0 0.0
    %835 = vmatprep.subr.mxu0 0.0
    %836 = vmatpush1.msra.mxu0 0.0
    %837 = vmatprep.subr.mxu0 0.0
    %838 = vmatpush1.msra.mxu0 0.0
    %839 = vmatprep.subr.mxu0 0.0
    %840 = vmatpush1.msra.mxu0 0.0
    %841 = vmatprep.subr.mxu0 0.0
    %842 = vmatpush1.msra.mxu0 0.0
    %843 = vmatprep.subr.mxu0 0.0
    %844 = vmatpush1.msra.mxu0 0.0
    %845 = vmatprep.subr.mxu0 0.0
    %846 = vmatpush1.msra.mxu0 0.0
    %847 = vmatprep.subr.mxu0 0.0
    %848 = vmatpush1.msra.mxu0 0.0
    %849 = vmatprep.subr.mxu0 0.0
    %850 = vmatpush1.msra.mxu0 0.0
    %851 = vmatprep.subr.mxu0 0.0
    %852 = vmatpush1.msra.mxu0 0.0
    %853 = vmatprep.subr.mxu0 0.0
    %854 = vmatpush1.msra.mxu0 0.0
    %855 = vmatprep.subr.mxu0 0.0
    %856 = vmatpush1.msra.mxu0 0.0
    %857 = vmatprep.subr.mxu0 0.0
    %858 = vmatpush1.msra.mxu0 0.0
    %859 = vmatprep.subr.mxu0 0.0
    %860 = vmatpush1.msra.mxu0 0.0
    %861 = vmatprep.subr.mxu0 0.0
    %862 = vmatpush1.msra.mxu0 0.0
    %863 = vmatprep.mubr.f32.mxu0 0.0
    %864 = vmatmul.mubr.f32.gmra.mrb[0].mxu0 %v773
    %v865 = vpop.f32.mrb[0].mxu0
    %v866 = vadd.f32 %v797, %v865
    %v867 = vpop.f32.mrb[0].mxu0
    %868 = vmatprep.mubr.f32.mxu0 0.0
    %869 = vmatmul.mubr.f32.gmra.mrb[0].mxu0 %v774
    %v870 = vpop.f32.mrb[0].mxu0
    %v871 = vadd.f32 %v797, %v870
    %v872 = vpop.f32.mrb[0].mxu0
    %873 = vmatprep.mubr.f32.mxu0 0.0
    %874 = vmatmul.mubr.f32.gmra.mrb[0].mxu0 %v775
    %v875 = vpop.f32.mrb[0].mxu0
    %v876 = vadd.f32 %v797, %v875
    %v877 = vpop.f32.mrb[0].mxu0
    %878 = vdwg.mxu0
    %879 = vst [vmem:[%s7] sm:$0xff] %v866
    %880 = vst [vmem:[%s7 + $0x8] sm:$0xff] %v871
    %881 = vst [vmem:[%s7 + $0x10] sm:$0xff] %v876
    // Predicated region
    $region34: #{medium_network_forward.1} parent=1 // pred_check
      _
    $region35: #{medium_network_forward.1} parent=1 // pred_check_branch
      %883 = sbr.rel (0) target = $region37
    $region36: #{medium_network_forward.1} parent=1 // pred_region
      _
    $region37: #{medium_network_forward.1} parent=1 // pred_fallthru
      _
    // Predicated region
    $region38: #{medium_network_forward.1} parent=1 // pred_check
      _
    $region39: #{medium_network_forward.1} parent=1 // pred_check_branch
      %885 = sbr.rel (0) target = $region41
    $region40: #{medium_network_forward.1} parent=1 // pred_region
      _
    $region41: #{medium_network_forward.1} parent=1 // pred_fallthru
      _
    %886 = vsyncpa [#allocation3], 1

</llo_original>
